<compile_context>
chip_gen: v5e
topology: v5e:2x2
jax: 0.10.0
libtpu: 0.0.40
codegen_flags: <defaults>
</compile_context>

<pallas_src>
import math
import jax
import jax.numpy as jnp
from jax.experimental import pallas as pl
from jax.experimental.pallas import tpu as pltpu

J = 32                        # number of key positions (fixed by mask shape (1, 32))
SCALE = 1.0 / math.sqrt(32.0)
LANE = 128                    # TPU vreg lane width


def _round_up(x, m):
    return (x + m - 1) // m * m


def attn_kernel(q_ref, k_ref, mask_ref, v_ref, o_ref):
    # q_ref    : (1, 1, T) f32   lane-dense row of queries (T = tile_rows)
    # k_ref    : (J, 1)    f32   keys, pre-scaled by 1/sqrt(32) on the host
    # mask_ref : (J, 1)    f32
    # v_ref    : (D, J)    bf16  v2 transposed on the host
    # o_ref    : (D, T)    f32   transposed output tile (fully lane-dense)
    q_row = q_ref[0]                                          # (1, T)
    # scores[j, t] = q[t] * k_scaled[j] + mask[j]  -> (J, T), lane-dense
    scores = k_ref[...] * q_row + mask_ref[...]
    mx = jnp.max(scores, axis=0, keepdims=True)               # (1, T)
    e = jnp.exp(scores - mx)                                  # (J, T) f32
    # EUP approx reciprocal; normalize AFTER the dot (one (1,T)-broadcast mul).
    inv = pl.reciprocal(jnp.sum(e, axis=0, keepdims=True), approx=True)
    out_t = jnp.dot(v_ref[...], e.astype(jnp.bfloat16),
                    preferred_element_type=jnp.float32)        # (D, T) on MXU
    o_ref[...] = out_t * inv


def model_forward(q, k, v2, mask, *, tile_rows=512):
    B, S = q.shape
    Jk, one = k.shape
    assert one == 1 and Jk == J
    Jv, D = v2.shape
    assert Jv == J
    BS = B * S

    # Large tiles amortize the ~0.35us per-grid-step overhead; keep tile_rows a
    # multiple of 128 so the (J, T) / (D, T) slabs are lane-dense and output
    # stores are unmasked.  Cap at the padded problem size so tiny inputs are
    # not over-padded; 512 keeps the grid >= 2 steps (v7x megacore) for any
    # reasonably sized problem and stays far below VMEM limits on v5e/v6e/v7x.
    tile_rows = max(LANE, _round_up(min(tile_rows, BS), LANE))
    BS_pad = _round_up(BS, tile_rows)
    num_tiles = BS_pad // tile_rows

    # q as lane-dense rows (num_tiles, 1, tile_rows); zero padding rows give
    # finite softmax values and are sliced off below.
    q_flat = q.reshape(BS).astype(jnp.float32)
    if BS_pad != BS:
        q_flat = jnp.pad(q_flat, (0, BS_pad - BS))
    q_rows = q_flat.reshape(num_tiles, 1, tile_rows)

    # Fold the 1/sqrt(32) scale into k on the host; mask as a (J, 1) column.
    k_col = (k.reshape(J, 1) * SCALE).astype(jnp.float32)
    mask_col = mask.reshape(J, 1).astype(jnp.float32)
    # v2 transposed + bf16 for the MXU dot (accumulation stays f32 in-kernel).
    v_t = v2.T.astype(jnp.bfloat16)                            # (D, J)

    out_t = pl.pallas_call(
        attn_kernel,
        out_shape=jax.ShapeDtypeStruct((D, BS_pad), jnp.float32),
        grid=(num_tiles,),
        in_specs=[
            pl.BlockSpec((1, 1, tile_rows), lambda i: (i, 0, 0)),  # q tile
            pl.BlockSpec((J, 1), lambda i: (0, 0)),                # k (replicated)
            pl.BlockSpec((J, 1), lambda i: (0, 0)),                # mask (replicated)
            pl.BlockSpec((D, J), lambda i: (0, 0)),                # v2^T (replicated)
        ],
        out_specs=pl.BlockSpec((D, tile_rows), lambda i: (0, i)),
        compiler_params=pltpu.CompilerParams(
            dimension_semantics=("parallel",)),
    )(q_rows, k_col, mask_col, v_t)

    # Kernel emitted the transposed (D, BS_pad) slab; slice off padding and let
    # XLA do the final transpose back to (B, S, D).
    return out_t[:, :BS].T.reshape(B, S, D)


def model_forward_ref(q, k, v2, mask):
    # Pure-JAX reference mirroring the PyTorch forward (f32 throughout).
    qk = q[..., None] * k.reshape(1, 1, J)            # (B, S, 32) outer product
    qk = qk / math.sqrt(32.0) + mask.reshape(1, 1, J)
    attn = jax.nn.softmax(qk, axis=-1)
    return attn @ v2                                   # (B, S, D)


if __name__ == "__main__":
    key = jax.random.PRNGKey(0)
    kq, kk, kv = jax.random.split(key, 3)
    B, S, D = 2, 8, 32
    q = jax.random.normal(kq, (B, S), dtype=jnp.float32)
    k = jax.random.normal(kk, (J, 1), dtype=jnp.float32)
    v2 = jax.random.normal(kv, (J, D), dtype=jnp.float32)
    # In the source file: mask = (torch.rand(1,32) > 0.7).fill_(-1e9) yields an
    # all-True bool tensor; adding it to a float tensor promotes every entry to 1.0.
    mask = jnp.ones((1, J), dtype=jnp.float32)

    out = jax.block_until_ready(model_forward(q, k, v2, mask))
    ref = model_forward_ref(q, k, v2, mask)
    assert out.shape == (B, S, D)
    # bf16 MXU dot + approx reciprocal -> tolerance loosened vs. the pure-f32 ref.
    assert jnp.allclose(out, ref, atol=2e-2, rtol=2e-2), float(
        jnp.max(jnp.abs(out - ref)))
    print("KERNEL_OK")
</pallas_src>

<mosaic_0001>
module attributes {stable_mosaic.version = 11 : i64} {
  func.func @attn_kernel(%arg0: i32, %arg1: memref<1x1x128xf32, #tpu.memory_space<vmem>>, %arg2: memref<32x1xf32, #tpu.memory_space<vmem>>, %arg3: memref<32x1xf32, #tpu.memory_space<vmem>>, %arg4: memref<32x32xbf16, #tpu.memory_space<vmem>>, %arg5: memref<32x128xf32, #tpu.memory_space<vmem>>) attributes {dimension_semantics = [#tpu.dimension_semantics<parallel>], iteration_bounds = array<i64: 1>, scalar_prefetch = 0 : i64, scratch_operands = 0 : i64, tpu.core_type = #tpu.core_type<tc>, window_params = [{transform_indices = @transform_0, window_bounds = array<i64: 1, 1, 128>}, {pipeline_mode = #tpu.pipeline_mode<synchronous>, transform_indices = @transform_1, window_bounds = array<i64: 32, 1>}, {pipeline_mode = #tpu.pipeline_mode<synchronous>, transform_indices = @transform_2, window_bounds = array<i64: 32, 1>}, {pipeline_mode = #tpu.pipeline_mode<synchronous>, transform_indices = @transform_3, window_bounds = array<i64: 32, 32>}, {transform_indices = @transform_4, window_bounds = array<i64: 32, 128>}]} {
    %c0 = arith.constant 0 : index
    %c0_0 = arith.constant 0 : index
    %c0_1 = arith.constant 0 : index
    %0 = vector.load %arg1[%c0, %c0_0, %c0_1] : memref<1x1x128xf32, #tpu.memory_space<vmem>>, vector<1x1x128xf32>
    %1 = vector.shape_cast %0 : vector<1x1x128xf32> to vector<1x128xf32>
    %c0_2 = arith.constant 0 : index
    %c0_3 = arith.constant 0 : index
    %2 = vector.load %arg2[%c0_2, %c0_3] : memref<32x1xf32, #tpu.memory_space<vmem>>, vector<32x1xf32>
    %3 = vector.broadcast %2 : vector<32x1xf32> to vector<32x128xf32>
    %4 = vector.broadcast %1 : vector<1x128xf32> to vector<32x128xf32>
    %5 = arith.mulf %3, %4 : vector<32x128xf32>
    %c0_4 = arith.constant 0 : index
    %c0_5 = arith.constant 0 : index
    %6 = vector.load %arg3[%c0_4, %c0_5] : memref<32x1xf32, #tpu.memory_space<vmem>>, vector<32x1xf32>
    %7 = vector.broadcast %6 : vector<32x1xf32> to vector<32x128xf32>
    %8 = arith.addf %5, %7 : vector<32x128xf32>
    %cst = arith.constant dense<0xFF800000> : vector<128xf32>
    %9 = vector.multi_reduction <maximumf>, %8, %cst [0] : vector<32x128xf32> to vector<128xf32>
    %10 = vector.shape_cast %9 : vector<128xf32> to vector<1x128xf32>
    %11 = vector.broadcast %10 : vector<1x128xf32> to vector<32x128xf32>
    %12 = arith.subf %8, %11 : vector<32x128xf32>
    %13 = math.exp %12 : vector<32x128xf32>
    %cst_6 = arith.constant dense<0.000000e+00> : vector<128xf32>
    %14 = vector.multi_reduction <add>, %13, %cst_6 [0] : vector<32x128xf32> to vector<128xf32>
    %15 = vector.shape_cast %14 : vector<128xf32> to vector<1x128xf32>
    %16 = tpu.reciprocal %15 {approx = true} : vector<1x128xf32> -> vector<1x128xf32>
    %c0_7 = arith.constant 0 : index
    %c0_8 = arith.constant 0 : index
    %17 = vector.load %arg4[%c0_7, %c0_8] : memref<32x32xbf16, #tpu.memory_space<vmem>>, vector<32x32xbf16>
    %18 = arith.truncf %13 : vector<32x128xf32> to vector<32x128xbf16>
    %cst_9 = arith.constant dense<0.000000e+00> : vector<32x128xf32>
    %19 = tpu.matmul %17, %18, %cst_9 {dimension_numbers = #tpu.dot_dimension_numbers<[1], [0], [0], [1], [0, 0, 1, 1], [], []>} : vector<32x32xbf16>, vector<32x128xbf16>, vector<32x128xf32> -> vector<32x128xf32>
    %20 = vector.broadcast %16 : vector<1x128xf32> to vector<32x128xf32>
    %21 = arith.mulf %19, %20 : vector<32x128xf32>
    %c0_10 = arith.constant 0 : index
    %c0_11 = arith.constant 0 : index
    %22 = vector.load %arg5[%c0_10, %c0_11] : memref<32x128xf32, #tpu.memory_space<vmem>>, vector<32x128xf32>
    tpu.vector_store %arg5[%c0_10, %c0_11], %21 {strides = array<i32>} : memref<32x128xf32, #tpu.memory_space<vmem>>, vector<32x128xf32>,
    return
  }
  func.func @transform_0(%arg0: i32) -> (i32, i32, i32) {
    %c0_i32 = arith.constant 0 : i32
    %c0_i32_0 = arith.constant 0 : i32
    %c0_i32_1 = arith.constant 0 : i32
    return %arg0, %c0_i32, %c0_i32_0 : i32, i32, i32
  }
  func.func @transform_1(%arg0: i32) -> (i32, i32) {
    %c0_i32 = arith.constant 0 : i32
    %c0_i32_0 = arith.constant 0 : i32
    %c0_i32_1 = arith.constant 0 : i32
    return %c0_i32, %c0_i32_0 : i32, i32
  }
  func.func @transform_2(%arg0: i32) -> (i32, i32) {
    %c0_i32 = arith.constant 0 : i32
    %c0_i32_0 = arith.constant 0 : i32
    %c0_i32_1 = arith.constant 0 : i32
    return %c0_i32, %c0_i32_0 : i32, i32
  }
  func.func @transform_3(%arg0: i32) -> (i32, i32) {
    %c0_i32 = arith.constant 0 : i32
    %c0_i32_0 = arith.constant 0 : i32
    %c0_i32_1 = arith.constant 0 : i32
    return %c0_i32, %c0_i32_0 : i32, i32
  }
  func.func @transform_4(%arg0: i32) -> (i32, i32) {
    %c0_i32 = arith.constant 0 : i32
    %c0_i32_0 = arith.constant 0 : i32
    return %c0_i32, %arg0 : i32, i32
  }
}

</mosaic_0001>

<llo_original>
// kernel: tpu_custom_call.1
$region0: #{tpu_custom_call.1}
  #allocation0 [shape = 'u32[]', space=smem, size = 0x4, offset = 0x4, fixed_abs, tag = 'smem constant byte address 0x4 - core index']
  #allocation1 [shape = 'u32[72,128]{1,0:T(1,128)}', space=vmem, size = 0x9000, scoped, tag = 'internal scratch']
  %s0 = inlined_call_operand.vmem [shape: f32[1,1,128], index: 0, kind: input, shape index: {}]
  %s1 = inlined_call_operand.vmem [shape: f32[32,1], index: 1, kind: input, shape index: {}]
  %s2 = inlined_call_operand.vmem [shape: f32[32,1], index: 2, kind: input, shape index: {}]
  %s3 = inlined_call_operand.vmem [shape: bf16[32,32], index: 3, kind: input, shape index: {}]
  %s4 = inlined_call_operand.hbm [shape: f32[32,128], index: 4, kind: output, shape index: {}]
  %s5 = sld [smem:[#allocation0]]
  $region26: #{tpu_custom_call.1} parent=0
    _
  %s7 = ssub.s32 1, %s5
  %s8 = scalar_select 0, %s7, %s5
  $region1: #{tpu_custom_call.1} parent=0
    #allocation2 [shape = 'u8[16384]{0}', space=vmem, size = 0x4000, scoped, tag = 'output window, operand 0, single buffered']
    #allocation3 [shape = 's32[1]{0}', space=sflag, size = 0x4, scoped, tag = 'scoped memory for tpu_custom_call.1']
    %9 = vsyncpa [#allocation3], 0
    // Predicated region
    $region2: #{tpu_custom_call.1} parent=1 // pred_check
      _
    $region3: #{tpu_custom_call.1} parent=1 // pred_check_branch
      %11 = sbr.rel (0) target = $region5
    $region4: #{tpu_custom_call.1} parent=1 // pred_region
      _
    $region5: #{tpu_custom_call.1} parent=1 // pred_fallthru
      _
    // Predicated region
    $region6: #{tpu_custom_call.1} parent=1 // pred_check
      _
    $region7: #{tpu_custom_call.1} parent=1 // pred_check_branch
      %13 = sbr.rel (0) target = $region9
    $region8: #{tpu_custom_call.1} parent=1 // pred_region
      _
    $region9: #{tpu_custom_call.1} parent=1 // pred_fallthru
      _
    // Predicated region
    $region10: #{tpu_custom_call.1} parent=1 // pred_check
      _
    $region11: #{tpu_custom_call.1} parent=1 // pred_check_branch
      %15 = sbr.rel (0) target = $region13
    $region12: #{tpu_custom_call.1} parent=1 // pred_region
      _
    $region13: #{tpu_custom_call.1} parent=1 // pred_fallthru
      _
    // Predicated region
    $region14: #{tpu_custom_call.1} parent=1 // pred_check
      _
    $region15: #{tpu_custom_call.1} parent=1 // pred_check_branch
      %17 = sbr.rel (0) target = $region17
    $region16: #{tpu_custom_call.1} parent=1 // pred_region
      _
    $region17: #{tpu_custom_call.1} parent=1 // pred_fallthru
      _
    %v19 = vld [vmem:[%s0] sm:$0x1]
    %v20 = vld [vmem:[%s1] sm:$0xff]
    %v21 = vld [vmem:[%s1 + $0x8] sm:$0xff]
    %v22 = vld [vmem:[%s1 + $0x10] sm:$0xff]
    %v23 = vld [vmem:[%s1 + $0x18] sm:$0xff]
    %25 = vset.pattern.permute.xlu0 0
    %26 = vperm.xlu0 %25, %v20
    %v27 = vpop.permute.xlu0 %26
    %30 = vset.pattern.permute.xlu0 0
    %31 = vperm.xlu0 %30, %v21
    %v32 = vpop.permute.xlu0 %31
    %35 = vset.pattern.permute.xlu0 0
    %36 = vperm.xlu0 %35, %v22
    %v37 = vpop.permute.xlu0 %36
    %40 = vset.pattern.permute.xlu0 0
    %41 = vperm.xlu0 %40, %v23
    %v42 = vpop.permute.xlu0 %41
    %v45 = vperm.slane %v19, 0
    %v47 = vmul.f32 %v27, %v45
    %v48 = vmul.f32 %v32, %v45
    %v49 = vmul.f32 %v37, %v45
    %v50 = vmul.f32 %v42, %v45
    %v51 = vld [vmem:[%s2] sm:$0xff]
    %v52 = vld [vmem:[%s2 + $0x8] sm:$0xff]
    %v53 = vld [vmem:[%s2 + $0x10] sm:$0xff]
    %v54 = vld [vmem:[%s2 + $0x18] sm:$0xff]
    %56 = vset.pattern.permute.xlu0 0
    %57 = vperm.xlu0 %56, %v51
    %v58 = vpop.permute.xlu0 %57
    %61 = vset.pattern.permute.xlu0 0
    %62 = vperm.xlu0 %61, %v52
    %v63 = vpop.permute.xlu0 %62
    %66 = vset.pattern.permute.xlu0 0
    %67 = vperm.xlu0 %66, %v53
    %v68 = vpop.permute.xlu0 %67
    %71 = vset.pattern.permute.xlu0 0
    %72 = vperm.xlu0 %71, %v54
    %v73 = vpop.permute.xlu0 %72
    %v75 = vadd.f32 %v47, %v58
    %v76 = vadd.f32 %v48, %v63
    %v77 = vadd.f32 %v49, %v68
    %v78 = vadd.f32 %v50, %v73
    %v79 = vmax.f32 %v75, %v76
    %v80 = vmax.f32 %v77, %v78
    %v81 = vmax.f32 %v79, %v80
    %v82 = vrot.slane %v81, 4
    %v83 = vmax.f32 %v81, %v82
    %v84 = vrot.slane %v83, 2
    %v85 = vmax.f32 %v83, %v84
    %v86 = vrot.slane %v85, 1
    %v87 = vmax.f32 %v85, %v86
    %v88 = vsub.f32 %v75, %v87
    %v89 = vsub.f32 %v76, %v87
    %v90 = vsub.f32 %v77, %v87
    %v91 = vsub.f32 %v78, %v87
    %v92 = vmul.f32 %v88, 1.442695
    %v93 = vpow.pop %v92
    %v94 = vmul.f32 %v89, 1.442695
    %v95 = vpow.pop %v94
    %v96 = vmul.f32 %v90, 1.442695
    %v97 = vpow.pop %v96
    %v98 = vmul.f32 %v91, 1.442695
    %v99 = vpow.pop %v98
    %v100 = vadd.f32 %v93, %v95
    %v101 = vadd.f32 %v100, %v97
    %v102 = vadd.f32 %v101, %v99
    %v103 = vrot.slane %v102, 4
    %v104 = vadd.f32 %v102, %v103
    %v105 = vrot.slane %v104, 2
    %v106 = vadd.f32 %v104, %v105
    %v107 = vrot.slane %v106, 1
    %v108 = vadd.f32 %v106, %v107
    %v109 = vrcp.pop %v108
    %v110 = vld [vmem:[%s3] sm:$0xf]
    %v111 = vld [vmem:[%s3 + $0x4] sm:$0xf]
    %v112 = vld [vmem:[%s3 + $0x8] sm:$0xf]
    %v113 = vld [vmem:[%s3 + $0xc] sm:$0xf]
    %v114 = vpack.c.bf16 %v95, %v93
    %v115 = vpack.c.bf16 %v99, %v97
    %v120 = vunpack.c.l.b16 %v110
    %v121 = vunpack.c.l.b16 %v111
    %v122 = vunpack.c.l.b16 %v112
    %v123 = vunpack.c.l.b16 %v113
    %v124 = vpack.c.b16 %v121, %v120
    %v125 = vpack.c.b16 %v123, %v122
    %vm126 = vcmask 261120
    %v128 = vsel %vm126, %v124, 0
    %v131 = vsel %vm126, %v125, 0
    %133 = vmatpush.bf16.msra.mxu0 0
    %134 = vmatpush.bf16.msra.mxu0 0
    %135 = vmatpush.bf16.msra.mxu0 0
    %136 = vmatpush.bf16.msra.mxu0 0
    %137 = vmatpush.bf16.msra.mxu0 0
    %138 = vmatpush.bf16.msra.mxu0 0
    %139 = vmatpush.bf16.msra.mxu0 %v115
    %140 = vmatpush.bf16.msra.mxu0 %v114
    %141 = vmatmul.bf16.gmra.mxu0 %v128
    %v142 = vpop.f32.mrf.mxu0
    %v143 = vadd.f32 0.0, %v142
    %v144 = vpop.f32.mrf.mxu0
    %v145 = vadd.f32 0.0, %v144
    %146 = vmatmul.bf16.gmra.mxu0 %v131
    %v147 = vpop.f32.mrf.mxu0
    %v148 = vadd.f32 0.0, %v147
    %v149 = vpop.f32.mrf.mxu0
    %v150 = vadd.f32 0.0, %v149
    %151 = vdwg.mxu0
    %v152 = vmul.f32 %v143, %v109
    %v153 = vmul.f32 %v145, %v109
    %v154 = vmul.f32 %v148, %v109
    %v155 = vmul.f32 %v150, %v109
    %156 = vst [vmem:[#allocation2] sm:$0xff] %v152
    %157 = vst [vmem:[#allocation2 + $0x8] sm:$0xff] %v153
    %158 = vst [vmem:[#allocation2 + $0x10] sm:$0xff] %v154
    %159 = vst [vmem:[#allocation2 + $0x18] sm:$0xff] %v155
    // Predicated region
    $region18: #{tpu_custom_call.1} parent=1 // pred_check
      _
    $region19: #{tpu_custom_call.1} parent=1 // pred_check_branch
      %161 = sbr.rel (0) target = $region21
    $region20: #{tpu_custom_call.1} parent=1 // pred_region
      %163 = vsyncadd [#allocation3], 0
      %s164 = sshll.u32 [#allocation2], 4
      %s165 = int_to_ptr.vmem [resolvable:$true] %s164
      %s166 = sshll.u32 %s4, 4
      %s167 = int_to_ptr.hbm [resolvable:$true] %s166
      %172 = dma.vmem_to_hbm [thread:$0]  %s165, 512, %s167, [#allocation3], 128, 128, 8
    $region21: #{tpu_custom_call.1} parent=1 // pred_fallthru
      _
    // Predicated region
    $region22: #{tpu_custom_call.1} parent=1 // pred_check
      _
    $region23: #{tpu_custom_call.1} parent=1 // pred_check_branch
      %174 = sbr.rel (0) target = $region25
    $region24: #{tpu_custom_call.1} parent=1 // pred_region
      %176 = dma.done [#allocation3], 512
    $region25: #{tpu_custom_call.1} parent=1 // pred_fallthru
      _
    %177 = vsyncpa [#allocation3], 1

</llo_original>
